<compile_context>
chip_gen: v6e
topology: v6e:2x2x1
jax: 0.10.0
libtpu: 0.0.40
codegen_flags: <defaults>
</compile_context>

<pallas_src>
import functools
import math

import jax
import jax.numpy as jnp
import numpy as np
from jax import lax
from jax.experimental import pallas as pl
from jax.experimental.pallas import tpu as pltpu


def _layernorm_add_kernel(x_ref, pos_ref, gamma_ref, beta_ref, out_ref, *,
                          eps, inv_h):
    """One grid step: (tR, H) rows -> LayerNorm(x + pos) * gamma + beta."""
    # Add in fp32 in-register only; HBM traffic stays in the I/O dtypes.
    x = x_ref[...].astype(jnp.float32) + pos_ref[...].astype(jnp.float32)

    # One-pass statistics: two independent XLU reductions, no separate
    # full-tile `centered` temporary.
    mean = jnp.sum(x, axis=-1, keepdims=True) * inv_h
    mean_sq = jnp.sum(x * x, axis=-1, keepdims=True) * inv_h
    var = mean_sq - mean * mean
    inv = lax.rsqrt(var + eps)

    y = (x - mean) * inv * gamma_ref[...] + beta_ref[...]
    # TODO(synk): nn.Dropout is identity in eval mode; training-mode dropout
    # (pltpu.prng_seed / stateful_bernoulli) intentionally not applied here.
    out_ref[...] = y.astype(out_ref.dtype)


def _largest_tile_dividing(total, cap, step):
    """Largest multiple of `step` that is <= cap and divides `total`, or None."""
    t = (cap // step) * step
    while t >= step:
        if total % t == 0:
            return t
        t -= step
    return None


def bert_embeddings(input_embeds, position_ids, pos_table, gamma, beta,
                    eps=1e-12):
    B, S, H = input_embeds.shape
    R = B * S
    in_it = jnp.dtype(input_embeds.dtype).itemsize
    pos_it = jnp.dtype(pos_table.dtype).itemsize

    position_ids = jnp.asarray(position_ids, jnp.int32)
    # The module registers position_ids as arange(max_pos)[None]; a leading
    # dim of 1 (or a 1-D array) means the same positions for every batch row.
    shared_pos = position_ids.ndim == 1 or position_ids.shape[0] == 1

    # ---- row-tile selection (VMEM-budget aware, generation-safe) ----------
    # Bytes/row: in + out double-buffered, pos (double-buffered worst case),
    # plus ~3 live fp32 temporaries inside the kernel body.
    per_row = H * (4 * in_it + 2 * pos_it + 3 * 4)
    budget = 20 * 1024 * 1024                      # I/O + temps budget
    cap = max(8, min(2048, budget // per_row))
    cap = (cap // 8) * 8

    x2 = input_embeds.reshape(R, H)

    mode = None
    pos_arr = None
    pos_spec = None
    tR = None

    if shared_pos:
        ids_s = position_ids.reshape(-1)[:S]
        pos_s = jnp.take(pos_table, ids_s, axis=0)          # (S, H), table dtype
        m = math.lcm(S, 8)
        if m <= cap:
            # "resident" mode: pos block of tR rows (tR % S == 0) with a
            # constant index_map -> DMA'd into VMEM once, reused every step.
            tR = _largest_tile_dividing(R, cap, m)
            if tR is None:
                tR = min((cap // m) * m, ((R + m - 1) // m) * m)
            pos_arr = jnp.tile(pos_s, (tR // S, 1))          # (tR, H), tiny
            pos_spec = pl.BlockSpec((tR, H), lambda r: (0, 0))
            mode = "resident"
        elif S % 8 == 0:
            # "cycling" mode: pos stays (S, H); block index cycles with r.
            tR = _largest_tile_dividing(S, cap, 8) or 8
            n_pos_blocks = S // tR
            pos_arr = pos_s
            pos_spec = pl.BlockSpec((tR, H),
                                    lambda r: (r % n_pos_blocks, 0))
            mode = "cycling"

    if mode is None:
        # Fallback: positions may differ per batch row (or ragged S) ->
        # materialize the gathered embeddings flattened to (R, H).
        ids_full = jnp.broadcast_to(position_ids.reshape(-1, S), (B, S))
        pos_arr = jnp.take(pos_table, ids_full.reshape(-1), axis=0)   # (R, H)
        tR = _largest_tile_dividing(R, cap, 8)
        if tR is None:
            tR = min(cap, ((R + 7) // 8) * 8)
        pos_spec = pl.BlockSpec((tR, H), lambda r: (r, 0))
        mode = "materialized"

    # Pad the flattened row axis to a multiple of the tile (sliced off below).
    R_pad = ((R + tR - 1) // tR) * tR
    if R_pad != R:
        x2 = jnp.pad(x2, ((0, R_pad - R), (0, 0)))
        if mode == "materialized":
            pos_arr = jnp.pad(pos_arr, ((0, R_pad - R), (0, 0)))

    gamma2 = gamma.reshape(1, H).astype(jnp.float32)
    beta2 = beta.reshape(1, H).astype(jnp.float32)

    # Explicit scoped-VMEM limit sized from the actual footprint (covers the
    # 16 MiB v5e default; stays well under v7x's 64 MiB physical VMEM).
    est_vmem = tR * per_row + 8 * H * 4 + (1 << 20)
    vmem_limit = int(min(48 * 2**20, max(16 * 2**20, est_vmem + 8 * 2**20)))

    kernel = functools.partial(_layernorm_add_kernel,
                               eps=float(eps), inv_h=1.0 / H)

    out = pl.pallas_call(
        kernel,
        out_shape=jax.ShapeDtypeStruct((R_pad, H), input_embeds.dtype),
        grid=(R_pad // tR,),
        in_specs=[
            pl.BlockSpec((tR, H), lambda r: (r, 0)),   # input rows
            pos_spec,                                  # position embeddings
            pl.BlockSpec((1, H), lambda r: (0, 0)),    # LayerNorm gamma (resident)
            pl.BlockSpec((1, H), lambda r: (0, 0)),    # LayerNorm beta  (resident)
        ],
        out_specs=pl.BlockSpec((tR, H), lambda r: (r, 0)),
        compiler_params=pltpu.CompilerParams(
            dimension_semantics=("parallel",),
            vmem_limit_bytes=vmem_limit),
    )(x2, pos_arr, gamma2, beta2)

    return out[:R].reshape(B, S, H)


def bert_embeddings_ref(x, pid, tab, gamma, beta, eps=1e-12):
    pid = jnp.asarray(pid, jnp.int32)
    if pid.ndim == 1:
        pid = pid[None]
    pos = jnp.take(tab, pid, axis=0)                         # (Bp, S, H)
    emb = x.astype(jnp.float32) + pos.astype(jnp.float32)
    mean = emb.mean(-1, keepdims=True)
    var = ((emb - mean) ** 2).mean(-1, keepdims=True)
    return (emb - mean) / jnp.sqrt(var + eps) * gamma + beta


if __name__ == "__main__":
    # Small shapes consistent with the module's forward
    B, S, H = 2, 8, 32          # batch, seq, hidden_size
    MAX_POS = 16                # max_position_embeddings
    EPS = 1e-12                 # layer_norm_eps (BERT default)

    key = jax.random.PRNGKey(0)
    k_x, k_tab = jax.random.split(key)

    input_embeds = jax.random.normal(k_x, (B, S, H), dtype=jnp.float32)
    # Matches the module's registered buffer: arange(max_pos)[None, :S]
    position_ids = jnp.arange(S, dtype=jnp.int32)[None, :]

    pos_table = 0.02 * jax.random.normal(k_tab, (MAX_POS, H), dtype=jnp.float32)
    gamma = jnp.ones((H,), dtype=jnp.float32)    # LayerNorm weight
    beta = jnp.zeros((H,), dtype=jnp.float32)    # LayerNorm bias

    # Shared-positions path (the common / module-buffer case).
    out = bert_embeddings(input_embeds, position_ids, pos_table, gamma, beta,
                          eps=EPS)
    out = jax.block_until_ready(out)
    ref = bert_embeddings_ref(input_embeds, position_ids, pos_table,
                              gamma, beta, eps=EPS)
    np.testing.assert_allclose(np.asarray(out), np.asarray(ref),
                               rtol=1e-5, atol=1e-5)

    # General per-batch position_ids path (materialized fallback).
    pid_b = jnp.broadcast_to(jnp.arange(S, dtype=jnp.int32), (B, S))
    out_b = jax.block_until_ready(
        bert_embeddings(input_embeds, pid_b, pos_table, gamma, beta, eps=EPS))
    ref_b = bert_embeddings_ref(input_embeds, pid_b, pos_table, gamma, beta,
                                eps=EPS)
    np.testing.assert_allclose(np.asarray(out_b), np.asarray(ref_b),
                               rtol=1e-5, atol=1e-5)

    print("KERNEL_OK")
</pallas_src>

<mosaic_0001>
module attributes {stable_mosaic.version = 11 : i64} {
  func.func @_layernorm_add_kernel(%arg0: i32, %arg1: memref<16x32xf32, #tpu.memory_space<vmem>>, %arg2: memref<16x32xf32, #tpu.memory_space<vmem>>, %arg3: memref<1x32xf32, #tpu.memory_space<vmem>>, %arg4: memref<1x32xf32, #tpu.memory_space<vmem>>, %arg5: memref<16x32xf32, #tpu.memory_space<vmem>>) attributes {dimension_semantics = [#tpu.dimension_semantics<parallel>], iteration_bounds = array<i64: 1>, scalar_prefetch = 0 : i64, scratch_operands = 0 : i64, tpu.core_type = #tpu.core_type<tc>, window_params = [{transform_indices = @transform_0, window_bounds = array<i64: 16, 32>}, {pipeline_mode = #tpu.pipeline_mode<synchronous>, transform_indices = @transform_1, window_bounds = array<i64: 16, 32>}, {pipeline_mode = #tpu.pipeline_mode<synchronous>, transform_indices = @transform_2, window_bounds = array<i64: 1, 32>}, {pipeline_mode = #tpu.pipeline_mode<synchronous>, transform_indices = @transform_3, window_bounds = array<i64: 1, 32>}, {transform_indices = @transform_4, window_bounds = array<i64: 16, 32>}]} {
    %c0 = arith.constant 0 : index
    %c0_0 = arith.constant 0 : index
    %0 = vector.load %arg1[%c0, %c0_0] : memref<16x32xf32, #tpu.memory_space<vmem>>, vector<16x32xf32>
    %c0_1 = arith.constant 0 : index
    %c0_2 = arith.constant 0 : index
    %1 = vector.load %arg2[%c0_1, %c0_2] : memref<16x32xf32, #tpu.memory_space<vmem>>, vector<16x32xf32>
    %2 = arith.addf %0, %1 : vector<16x32xf32>
    %cst = arith.constant dense<0.000000e+00> : vector<16xf32>
    %3 = vector.multi_reduction <add>, %2, %cst [1] : vector<16x32xf32> to vector<16xf32>
    %4 = vector.shape_cast %3 : vector<16xf32> to vector<16x1xf32>
    %cst_3 = arith.constant 3.125000e-02 : f32
    %5 = vector.broadcast %cst_3 : f32 to vector<16x1xf32>
    %6 = arith.mulf %4, %5 : vector<16x1xf32>
    %7 = arith.mulf %2, %2 : vector<16x32xf32>
    %cst_4 = arith.constant dense<0.000000e+00> : vector<16xf32>
    %8 = vector.multi_reduction <add>, %7, %cst_4 [1] : vector<16x32xf32> to vector<16xf32>
    %9 = vector.shape_cast %8 : vector<16xf32> to vector<16x1xf32>
    %cst_5 = arith.constant 3.125000e-02 : f32
    %10 = vector.broadcast %cst_5 : f32 to vector<16x1xf32>
    %11 = arith.mulf %9, %10 : vector<16x1xf32>
    %12 = arith.mulf %6, %6 : vector<16x1xf32>
    %13 = arith.subf %11, %12 : vector<16x1xf32>
    %cst_6 = arith.constant 9.99999996E-13 : f32
    %14 = vector.broadcast %cst_6 : f32 to vector<16x1xf32>
    %15 = arith.addf %13, %14 : vector<16x1xf32>
    %16 = math.rsqrt %15 : vector<16x1xf32>
    %17 = vector.broadcast %6 : vector<16x1xf32> to vector<16x32xf32>
    %18 = arith.subf %2, %17 : vector<16x32xf32>
    %19 = vector.broadcast %16 : vector<16x1xf32> to vector<16x32xf32>
    %20 = arith.mulf %18, %19 : vector<16x32xf32>
    %c0_7 = arith.constant 0 : index
    %c0_8 = arith.constant 0 : index
    %21 = vector.load %arg3[%c0_7, %c0_8] : memref<1x32xf32, #tpu.memory_space<vmem>>, vector<1x32xf32>
    %22 = vector.broadcast %21 : vector<1x32xf32> to vector<16x32xf32>
    %23 = arith.mulf %20, %22 : vector<16x32xf32>
    %c0_9 = arith.constant 0 : index
    %c0_10 = arith.constant 0 : index
    %24 = vector.load %arg4[%c0_9, %c0_10] : memref<1x32xf32, #tpu.memory_space<vmem>>, vector<1x32xf32>
    %25 = vector.broadcast %24 : vector<1x32xf32> to vector<16x32xf32>
    %26 = arith.addf %23, %25 : vector<16x32xf32>
    %c0_11 = arith.constant 0 : index
    %c0_12 = arith.constant 0 : index
    %27 = vector.load %arg5[%c0_11, %c0_12] : memref<16x32xf32, #tpu.memory_space<vmem>>, vector<16x32xf32>
    tpu.vector_store %arg5[%c0_11, %c0_12], %26 {strides = array<i32>} : memref<16x32xf32, #tpu.memory_space<vmem>>, vector<16x32xf32>,
    return
  }
  func.func @transform_0(%arg0: i32) -> (i32, i32) {
    %c0_i32 = arith.constant 0 : i32
    %c0_i32_0 = arith.constant 0 : i32
    return %arg0, %c0_i32 : i32, i32
  }
  func.func @transform_1(%arg0: i32) -> (i32, i32) {
    %c0_i32 = arith.constant 0 : i32
    %c0_i32_0 = arith.constant 0 : i32
    %c0_i32_1 = arith.constant 0 : i32
    return %c0_i32, %c0_i32_0 : i32, i32
  }
  func.func @transform_2(%arg0: i32) -> (i32, i32) {
    %c0_i32 = arith.constant 0 : i32
    %c0_i32_0 = arith.constant 0 : i32
    %c0_i32_1 = arith.constant 0 : i32
    return %c0_i32, %c0_i32_0 : i32, i32
  }
  func.func @transform_3(%arg0: i32) -> (i32, i32) {
    %c0_i32 = arith.constant 0 : i32
    %c0_i32_0 = arith.constant 0 : i32
    %c0_i32_1 = arith.constant 0 : i32
    return %c0_i32, %c0_i32_0 : i32, i32
  }
  func.func @transform_4(%arg0: i32) -> (i32, i32) {
    %c0_i32 = arith.constant 0 : i32
    %c0_i32_0 = arith.constant 0 : i32
    return %arg0, %c0_i32 : i32, i32
  }
}

</mosaic_0001>

<llo_original>
// kernel: tpu_custom_call.1
$region0: #{tpu_custom_call.1}
  #allocation0 [shape = 'u32[]', space=smem, size = 0x4, offset = 0x4, fixed_abs, tag = 'smem constant byte address 0x4 - core index']
  #allocation1 [shape = 'u32[144,128]{1,0:T(1,128)}', space=vmem, size = 0x12000, scoped, tag = 'internal scratch']
  %s0 = inlined_call_operand.hbm [shape: f32[16,32], index: 0, kind: input, shape index: {}]
  %s1 = inlined_call_operand.hbm [shape: f32[16,32], index: 1, kind: input, shape index: {}]
  %s2 = inlined_call_operand.vmem [shape: f32[1,32], index: 2, kind: input, shape index: {}]
  %s3 = inlined_call_operand.vmem [shape: f32[1,32], index: 3, kind: input, shape index: {}]
  %s4 = inlined_call_operand.hbm [shape: f32[16,32], index: 4, kind: output, shape index: {}]
  %s5 = sld [smem:[#allocation0]]
  $region34: #{tpu_custom_call.1} parent=0
    _
  %s7 = ssub.s32 1, %s5
  %s8 = scalar_select 0, %s7, %s5
  $region1: #{tpu_custom_call.1} parent=0
    #allocation2 [shape = 'u8[8192]{0}', space=vmem, size = 0x2000, scoped, tag = 'input window, operand 0, single buffered']
    #allocation3 [shape = 's32[1]{0}', space=sflag, size = 0x4, scoped, tag = 'scoped memory for tpu_custom_call.1']
    #allocation4 [shape = 's32[1]{0}', space=sflag, size = 0x4, scoped, tag = 'scoped memory for tpu_custom_call.1']
    #allocation5 [shape = 'u8[8192]{0}', space=vmem, size = 0x2000, scoped, tag = 'input window, operand 1, single buffered']
    #allocation6 [shape = 's32[1]{0}', space=sflag, size = 0x4, scoped, tag = 'scoped memory for tpu_custom_call.1']
    #allocation7 [shape = 'u8[8192]{0}', space=vmem, size = 0x2000, scoped, tag = 'output window, operand 0, single buffered']
    %9 = vsyncpa [#allocation3], 0
    %10 = vsyncpa [#allocation6], 0
    %11 = vsyncpa [#allocation4], 0
    // Predicated region
    $region2: #{tpu_custom_call.1} parent=1 // pred_check
      _
    $region3: #{tpu_custom_call.1} parent=1 // pred_check_branch
      %13 = sbr.rel (0) target = $region5
    $region4: #{tpu_custom_call.1} parent=1 // pred_region
      %s15 = ssub.s32 256, 256
      %16 = vsyncadd [#allocation3], %s15
      %s17 = sshll.u32 [#allocation2], 4
      %s18 = int_to_ptr.vmem [resolvable:$true] %s17
      %23 = dma.hbm_to_vmem [thread:$0]  %s0, 256, %s18, [#allocation3], 128, 128, 8
    $region5: #{tpu_custom_call.1} parent=1 // pred_fallthru
      _
    // Predicated region
    $region6: #{tpu_custom_call.1} parent=1 // pred_check
      _
    $region7: #{tpu_custom_call.1} parent=1 // pred_check_branch
      %25 = sbr.rel (0) target = $region9
    $region8: #{tpu_custom_call.1} parent=1 // pred_region
      %s27 = ssub.s32 256, 256
      %28 = vsyncadd [#allocation6], %s27
      %s29 = sshll.u32 [#allocation5], 4
      %s30 = int_to_ptr.vmem [resolvable:$true] %s29
      %35 = dma.hbm_to_vmem [thread:$0]  %s1, 256, %s30, [#allocation6], 128, 128, 8
    $region9: #{tpu_custom_call.1} parent=1 // pred_fallthru
      _
    // Predicated region
    $region10: #{tpu_custom_call.1} parent=1 // pred_check
      _
    $region11: #{tpu_custom_call.1} parent=1 // pred_check_branch
      %37 = sbr.rel (0) target = $region13
    $region12: #{tpu_custom_call.1} parent=1 // pred_region
      _
    $region13: #{tpu_custom_call.1} parent=1 // pred_fallthru
      _
    // Predicated region
    $region14: #{tpu_custom_call.1} parent=1 // pred_check
      _
    $region15: #{tpu_custom_call.1} parent=1 // pred_check_branch
      %39 = sbr.rel (0) target = $region17
    $region16: #{tpu_custom_call.1} parent=1 // pred_region
      _
    $region17: #{tpu_custom_call.1} parent=1 // pred_fallthru
      _
    // Predicated region
    $region18: #{tpu_custom_call.1} parent=1 // pred_check
      _
    $region19: #{tpu_custom_call.1} parent=1 // pred_check_branch
      %41 = sbr.rel (0) target = $region21
    $region20: #{tpu_custom_call.1} parent=1 // pred_region
      %42 = dma.done [#allocation3], 256
    $region21: #{tpu_custom_call.1} parent=1 // pred_fallthru
      _
    // Predicated region
    $region22: #{tpu_custom_call.1} parent=1 // pred_check
      _
    $region23: #{tpu_custom_call.1} parent=1 // pred_check_branch
      %44 = sbr.rel (0) target = $region25
    $region24: #{tpu_custom_call.1} parent=1 // pred_region
      %45 = dma.done [#allocation6], 256
    $region25: #{tpu_custom_call.1} parent=1 // pred_fallthru
      _
    %v46 = vld [vmem:[#allocation2] sm:$0xff]
    %v47 = vld [vmem:[#allocation2 + $0x8] sm:$0xff]
    %v48 = vld [vmem:[#allocation5] sm:$0xff]
    %v49 = vld [vmem:[#allocation5 + $0x8] sm:$0xff]
    %v50 = vadd.f32 %v46, %v48
    %v51 = vadd.f32 %v47, %v49
    %vm52 = vcmask 261120
    %v53 = vsel %vm52, %v50, 0.0
    %54 = vadd.xlane.f32.xlu0 %v53
    %v55 = vpop.xlane.xlu0 %54
    %v56 = vsel %vm52, %v51, 0.0
    %57 = vadd.xlane.f32.xlu0 %v56
    %v58 = vpop.xlane.xlu0 %57
    %v59 = vmul.f32 %v55, 0.03125
    %v60 = vmul.f32 %v58, 0.03125
    %v61 = vmul.f32 %v50, %v50
    %v62 = vmul.f32 %v51, %v51
    %v63 = vsel %vm52, %v61, 0.0
    %64 = vadd.xlane.f32.xlu0 %v63
    %v65 = vpop.xlane.xlu0 %64
    %v66 = vsel %vm52, %v62, 0.0
    %67 = vadd.xlane.f32.xlu0 %v66
    %v68 = vpop.xlane.xlu0 %67
    %v69 = vmul.f32 %v65, 0.03125
    %v70 = vmul.f32 %v68, 0.03125
    %v71 = vmul.f32 %v59, %v59
    %v72 = vmul.f32 %v60, %v60
    %v73 = vsub.f32 %v69, %v71
    %v74 = vsub.f32 %v70, %v72
    %v75 = vadd.f32 %v73, 1e-12
    %v76 = vadd.f32 %v74, 1e-12
    %v77 = vrsqrt.pop %v75
    %v78 = vrsqrt.pop %v76
    %v79 = vsub.f32 %v50, %v59
    %v80 = vsub.f32 %v51, %v60
    %v81 = vmul.f32 %v79, %v77
    %v82 = vmul.f32 %v80, %v78
    %v83 = vld [vmem:[%s2] sm:$0x1]
    %v85 = vlaneseq
    %v86 = vshrl.u32 %v85, 7
    %v87 = vsub.s32 0, %v86
    %v88 = vrot.slane %v83, %v87
    %v90 = vmul.f32 %v81, %v88
    %v91 = vmul.f32 %v82, %v88
    %v92 = vld [vmem:[%s3] sm:$0x1]
    %v94 = vlaneseq
    %v95 = vshrl.u32 %v94, 7
    %v96 = vsub.s32 0, %v95
    %v97 = vrot.slane %v92, %v96
    %v99 = vadd.f32 %v90, %v97
    %v100 = vadd.f32 %v91, %v97
    %101 = vst.msk [vmem:[#allocation7] sm:$0xff] %vm52, %v99
    %102 = vst.msk [vmem:[#allocation7 + $0x8] sm:$0xff] %vm52, %v100
    // Predicated region
    $region26: #{tpu_custom_call.1} parent=1 // pred_check
      _
    $region27: #{tpu_custom_call.1} parent=1 // pred_check_branch
      %104 = sbr.rel (0) target = $region29
    $region28: #{tpu_custom_call.1} parent=1 // pred_region
      %s106 = ssub.s32 256, 256
      %107 = vsyncadd [#allocation4], %s106
      %s108 = sshll.u32 [#allocation7], 4
      %s109 = int_to_ptr.vmem [resolvable:$true] %s108
      %114 = dma.vmem_to_hbm [thread:$0]  %s109, 256, %s4, [#allocation4], 128, 128, 8
    $region29: #{tpu_custom_call.1} parent=1 // pred_fallthru
      _
    // Predicated region
    $region30: #{tpu_custom_call.1} parent=1 // pred_check
      _
    $region31: #{tpu_custom_call.1} parent=1 // pred_check_branch
      %116 = sbr.rel (0) target = $region33
    $region32: #{tpu_custom_call.1} parent=1 // pred_region
      %117 = dma.done [#allocation4], 256
    $region33: #{tpu_custom_call.1} parent=1 // pred_fallthru
      _
    %118 = vsyncpa [#allocation3], 1
    %119 = vsyncpa [#allocation6], 1
    %120 = vsyncpa [#allocation4], 1

</llo_original>
